<compile_context>
chip_gen: v7x
topology: tpu7x:2x2x1
jax: 0.10.0
libtpu: 0.0.40
codegen_flags: <defaults>
</compile_context>

<pallas_src>
import jax
import jax.numpy as jnp
from jax import lax
from jax.experimental import pallas as pl
from jax.experimental.pallas import tpu as pltpu

# TODO(synk): the PyTorch module reads these from environment variables
# (MOBILE_ROBOT_HL_MAX_*_VEL); baked as deterministic constants here.
MAX_LINEAR_VELOCITY = 0.5
MAX_ANGULAR_VELOCITY = 1.0

_WIDTH = 512        # lanes per block (multiple of 128 -> unmasked vst)
_BLOCK_ROWS = 512   # sublanes per block; 512*512*4 B = 1 MiB per f32 buffer


def _channel_consts(block_rows, width, ml, ma):
    """Per-element multiplier / adder reconstructed from (flat index % 3)."""
    i = pl.program_id(0)
    row = lax.broadcasted_iota(jnp.int32, (block_rows, width), 0)
    col = lax.broadcasted_iota(jnp.int32, (block_rows, width), 1)
    flat = (i * block_rows + row) * width + col
    ch = flat % 3
    mult = jnp.where(ch == 0, jnp.float32(ml),
                     jnp.where(ch == 1, jnp.float32(ma), jnp.float32(0.5)))
    add = jnp.where(ch == 2, jnp.float32(0.5), jnp.float32(0.0))
    return mult, add


def _make_det_kernel(ml, ma):
    """noise == 0.0 path: out = tanh(x) * mult + add."""
    def kernel(x_ref, o_ref):
        br, w = x_ref.shape
        mult, add = _channel_consts(br, w, ml, ma)
        x = x_ref[...].astype(jnp.float32)
        o_ref[...] = jnp.tanh(x) * mult + add
    return kernel


def _make_noisy_kernel(ml, ma, noise):
    """noise != 0 path; u_ref holds U[0,1) draws with the same layout as x."""
    noise = float(noise)

    def kernel(x_ref, u_ref, o_ref):
        br, w = x_ref.shape
        mult, add = _channel_consts(br, w, ml, ma)
        x = x_ref[...].astype(jnp.float32)
        u = u_ref[...]
        # noise_tensor = u * 2*mult - mult = (2u - 1) * mult, so:
        mix = noise * (2.0 * u - 1.0) + (1.0 - noise) * jnp.tanh(x)
        o_ref[...] = mult * mix + add
    return kernel


def output_processor(actor_output, noise=0.0, key=None,
                     max_linear_vel=MAX_LINEAR_VELOCITY,
                     max_angular_vel=MAX_ANGULAR_VELOCITY):
    """JAX/Pallas equivalent of OutputProcessor.forward."""
    orig_shape = actor_output.shape
    assert orig_shape[-1] == 3, "last dim must be 3 (lin_vel, ang_vel, term_flag)"
    noise = float(noise)

    # Flatten to 1-D (contiguous -> free), pad to a lane-dense (rows, 512) slab.
    x = actor_output.reshape(-1)
    n_elem = x.shape[0]
    rows = (n_elem + _WIDTH - 1) // _WIDTH

    if rows <= _BLOCK_ROWS:
        block_rows = max(int(rows), 1)
        grid_rows = block_rows           # single block == full array dims
    else:
        block_rows = _BLOCK_ROWS
        grid_rows = ((rows + _BLOCK_ROWS - 1) // _BLOCK_ROWS) * _BLOCK_ROWS

    padded = grid_rows * _WIDTH
    if padded != n_elem:
        x = jnp.pad(x, (0, padded - n_elem))
    x2 = x.reshape(grid_rows, _WIDTH)      # input dtype preserved; cast in-kernel

    grid = (grid_rows // block_rows,)

    def blk():
        return pl.BlockSpec((block_rows, _WIDTH), lambda i: (i, 0))

    out_shape = jax.ShapeDtypeStruct((grid_rows, _WIDTH), jnp.float32)
    cparams = pltpu.CompilerParams(
        dimension_semantics=("parallel",),
        vmem_limit_bytes=32 * 1024 * 1024,
    )

    if noise == 0.0:
        out2 = pl.pallas_call(
            _make_det_kernel(max_linear_vel, max_angular_vel),
            out_shape=out_shape,
            grid=grid,
            in_specs=[blk()],
            out_specs=blk(),
            compiler_params=cparams,
        )(x2)
    else:
        if key is None:
            key = jax.random.PRNGKey(0)
        u = jax.random.uniform(key, orig_shape, dtype=jnp.float32).reshape(-1)
        if padded != n_elem:
            u = jnp.pad(u, (0, padded - n_elem))
        u2 = u.reshape(grid_rows, _WIDTH)
        out2 = pl.pallas_call(
            _make_noisy_kernel(max_linear_vel, max_angular_vel, noise),
            out_shape=out_shape,
            grid=grid,
            in_specs=[blk(), blk()],
            out_specs=blk(),
            compiler_params=cparams,
        )(x2, u2)

    return out2.reshape(-1)[:n_elem].reshape(orig_shape)


if __name__ == "__main__":
    key = jax.random.PRNGKey(0)
    k_x, k_u = jax.random.split(key)
    batch, seq = 2, 8
    actor_output = jax.random.normal(k_x, (batch, seq, 3), dtype=jnp.float32)

    mult = jnp.array([MAX_LINEAR_VELOCITY, MAX_ANGULAR_VELOCITY, 0.5], jnp.float32)
    add = jnp.array([0.0, 0.0, 0.5], jnp.float32)

    # Deterministic path (noise = 0.0, the module default).
    out = jax.block_until_ready(output_processor(actor_output, noise=0.0))
    ref = jnp.tanh(actor_output) * mult + add
    assert out.shape == actor_output.shape
    assert jnp.allclose(out, ref, atol=1e-5), "deterministic path mismatch"

    # Noisy path (uniform draws generated from k_u in the wrapper).
    noise = 0.3
    out_noisy = jax.block_until_ready(
        output_processor(actor_output, noise=noise, key=k_u))
    u = jax.random.uniform(k_u, actor_output.shape, dtype=jnp.float32)
    noise_tensor = u * (2.0 * mult) - mult
    ref_noisy = noise * noise_tensor + (1.0 - noise) * jnp.tanh(actor_output) * mult + add
    assert out_noisy.shape == actor_output.shape
    assert jnp.allclose(out_noisy, ref_noisy, atol=1e-5), "noisy path mismatch"

    print("KERNEL_OK")
</pallas_src>

<mosaic_0001>
module attributes {stable_mosaic.version = 11 : i64} {
  func.func @kernel(%arg0: i32, %arg1: memref<1x512xf32, #tpu.memory_space<vmem>>, %arg2: memref<1x512xf32, #tpu.memory_space<vmem>>) attributes {dimension_semantics = [#tpu.dimension_semantics<parallel>], iteration_bounds = array<i64: 1>, scalar_prefetch = 0 : i64, scratch_operands = 0 : i64, tpu.core_type = #tpu.core_type<tc>, window_params = [{transform_indices = @transform_0, window_bounds = array<i64: 1, 512>}, {transform_indices = @transform_1, window_bounds = array<i64: 1, 512>}]} {
    %0 = tpu.iota {dimensions = array<i32: 0>} : vector<1x512xi32>
    %1 = tpu.iota {dimensions = array<i32: 1>} : vector<1x512xi32>
    %c1_i32 = arith.constant 1 : i32
    %2 = arith.muli %arg0, %c1_i32 : i32
    %3 = vector.broadcast %2 : i32 to vector<1x512xi32>
    %4 = arith.addi %3, %0 : vector<1x512xi32>
    %c512_i32 = arith.constant 512 : i32
    %5 = vector.broadcast %c512_i32 : i32 to vector<1x512xi32>
    %6 = arith.muli %4, %5 : vector<1x512xi32>
    %7 = arith.addi %6, %1 : vector<1x512xi32>
    %c3_i32 = arith.constant 3 : i32
    %c0_i32 = arith.constant 0 : i32
    %8 = arith.cmpi eq, %c3_i32, %c0_i32 : i32
    %c1_i32_0 = arith.constant 1 : i32
    %9 = arith.select %8, %c1_i32_0, %c3_i32 : i32
    %10 = vector.broadcast %9 : i32 to vector<1x512xi32>
    %11 = arith.remsi %7, %10 : vector<1x512xi32>
    %c0_i32_1 = arith.constant 0 : i32
    %12 = vector.broadcast %c0_i32_1 : i32 to vector<1x512xi32>
    %13 = arith.cmpi ne, %11, %12 : vector<1x512xi32>
    %c0_i32_2 = arith.constant 0 : i32
    %14 = vector.broadcast %c0_i32_2 : i32 to vector<1x512xi32>
    %15 = arith.cmpi slt, %11, %14 : vector<1x512xi32>
    %c0_i32_3 = arith.constant 0 : i32
    %16 = arith.cmpi slt, %9, %c0_i32_3 : i32
    %17 = vector.broadcast %16 : i1 to vector<1x512xi1>
    %18 = vector.broadcast %17 : vector<1x512xi1> to vector<1x512xi1>
    %19 = arith.xori %15, %18 : vector<1x512xi1>
    %20 = arith.andi %19, %13 : vector<1x512xi1>
    %21 = vector.broadcast %9 : i32 to vector<1x512xi32>
    %22 = arith.addi %11, %21 : vector<1x512xi32>
    %23 = arith.select %20, %22, %11 : vector<1x512xi1>, vector<1x512xi32>
    %c0_i32_4 = arith.constant 0 : i32
    %24 = vector.broadcast %c0_i32_4 : i32 to vector<1x512xi32>
    %25 = arith.cmpi eq, %23, %24 : vector<1x512xi32>
    %c1_i32_5 = arith.constant 1 : i32
    %26 = vector.broadcast %c1_i32_5 : i32 to vector<1x512xi32>
    %27 = arith.cmpi eq, %23, %26 : vector<1x512xi32>
    %cst = arith.constant 1.000000e+00 : f32
    %cst_6 = arith.constant 5.000000e-01 : f32
    %28 = vector.broadcast %cst : f32 to vector<1x512xf32>
    %29 = vector.broadcast %cst_6 : f32 to vector<1x512xf32>
    %30 = arith.select %27, %28, %29 : vector<1x512xi1>, vector<1x512xf32>
    %cst_7 = arith.constant 5.000000e-01 : f32
    %31 = vector.broadcast %cst_7 : f32 to vector<1x512xf32>
    %32 = arith.select %25, %31, %30 : vector<1x512xi1>, vector<1x512xf32>
    %c2_i32 = arith.constant 2 : i32
    %33 = vector.broadcast %c2_i32 : i32 to vector<1x512xi32>
    %34 = arith.cmpi eq, %23, %33 : vector<1x512xi32>
    %cst_8 = arith.constant 5.000000e-01 : f32
    %cst_9 = arith.constant 0.000000e+00 : f32
    %35 = vector.broadcast %cst_8 : f32 to vector<1x512xf32>
    %36 = vector.broadcast %cst_9 : f32 to vector<1x512xf32>
    %37 = arith.select %34, %35, %36 : vector<1x512xi1>, vector<1x512xf32>
    %c0 = arith.constant 0 : index
    %c0_10 = arith.constant 0 : index
    %38 = vector.load %arg1[%c0, %c0_10] : memref<1x512xf32, #tpu.memory_space<vmem>>, vector<1x512xf32>
    %39 = math.tanh %38 : vector<1x512xf32>
    %40 = arith.mulf %39, %32 : vector<1x512xf32>
    %41 = arith.addf %40, %37 : vector<1x512xf32>
    %c0_11 = arith.constant 0 : index
    %c0_12 = arith.constant 0 : index
    %42 = vector.load %arg2[%c0_11, %c0_12] : memref<1x512xf32, #tpu.memory_space<vmem>>, vector<1x512xf32>
    tpu.vector_store %arg2[%c0_11, %c0_12], %41 {strides = array<i32>} : memref<1x512xf32, #tpu.memory_space<vmem>>, vector<1x512xf32>,
    return
  }
  func.func @transform_0(%arg0: i32) -> (i32, i32) {
    %c0_i32 = arith.constant 0 : i32
    %c0_i32_0 = arith.constant 0 : i32
    return %arg0, %c0_i32 : i32, i32
  }
  func.func @transform_1(%arg0: i32) -> (i32, i32) {
    %c0_i32 = arith.constant 0 : i32
    %c0_i32_0 = arith.constant 0 : i32
    return %arg0, %c0_i32 : i32, i32
  }
}

</mosaic_0001>

<llo_original>
// kernel: tpu_custom_call.1
$region0: #{tpu_custom_call.1}
  #allocation0 [shape = 'u32[]', space=smem, size = 0x4, offset = 0x4, fixed_abs, tag = 'smem constant byte address 0x4 - core index']
  #allocation1 [shape = 'u32[144,128]{1,0:T(1,128)}', space=vmem, size = 0x12000, scoped, tag = 'internal scratch']
  %s0 = inlined_call_operand.hbm [shape: f32[1,512], index: 0, kind: input, shape index: {}]
  %s1 = inlined_call_operand.hbm [shape: f32[1,512], index: 1, kind: output, shape index: {}]
  %s2 = sld [smem:[#allocation0]]
  $region18: #{tpu_custom_call.1} parent=0
    _
  %s4 = ssub.s32 1, %s2
  %s5 = scalar_select 0, %s4, %s2
  $region1: #{tpu_custom_call.1} parent=0
    #allocation2 [shape = 'u8[2048]{0}', space=vmem, size = 0x800, scoped, tag = 'input window, operand 0, single buffered']
    #allocation3 [shape = 's32[1]{0}', space=sflag, size = 0x4, scoped, tag = 'scoped memory for tpu_custom_call.1']
    #allocation4 [shape = 's32[1]{0}', space=sflag, size = 0x4, scoped, tag = 'scoped memory for tpu_custom_call.1']
    #allocation5 [shape = 'u8[2048]{0}', space=vmem, size = 0x800, scoped, tag = 'output window, operand 0, single buffered']
    %6 = vsyncpa [#allocation3], 0
    %7 = vsyncpa [#allocation4], 0
    // Predicated region
    $region2: #{tpu_custom_call.1} parent=1 // pred_check
      _
    $region3: #{tpu_custom_call.1} parent=1 // pred_check_branch
      %9 = sbr.rel (0) target = $region5
    $region4: #{tpu_custom_call.1} parent=1 // pred_region
      %s11 = ssub.s32 64, 64
      %12 = vsyncadd [#allocation3], %s11
      %s14 = sshll.u32 [#allocation2], 4
      %s15 = int_to_ptr.vmem [resolvable:$true] %s14
      %17 = dma.hbm_to_vmem [thread:$0]  %s0, 64, %s15, [#allocation3]
    $region5: #{tpu_custom_call.1} parent=1 // pred_fallthru
      _
    // Predicated region
    $region6: #{tpu_custom_call.1} parent=1 // pred_check
      _
    $region7: #{tpu_custom_call.1} parent=1 // pred_check_branch
      %19 = sbr.rel (0) target = $region9
    $region8: #{tpu_custom_call.1} parent=1 // pred_region
      %20 = dma.done [#allocation3], 64
    $region9: #{tpu_custom_call.1} parent=1 // pred_fallthru
      _
    %v21 = vlaneseq
    %v22 = vshrl.u32 %v21, 7
    %v23 = vlaneseq
    %v24 = vand.u32 %v23, 127
    %v25 = vadd.s32 %v24, 128
    %v26 = vadd.s32 %v24, 256
    %v27 = vadd.s32 %v24, 384
    %v28 = vstv 0
    %v29 = vadd.s32 %v28, %v22
    %v30 = vmul.u32 %v29, 512
    %v31 = vadd.s32 %v30, %v24
    %v32 = vadd.s32 %v30, %v25
    %v33 = vadd.s32 %v30, %v26
    %v34 = vadd.s32 %v30, %v27
    %vm35 = vcmp.lt.s32.totalorder %v31, 0
    %v36 = vsub.s32 0, %v31
    %v37 = vsel %vm35, %v36, %v31
    %v38 = vmul.u32.u64.compose %v37, 2863311531
    %v39 = vextract.low.u32 %v38
    %v40 = vextract.high.u32 %v38
    %v41 = vshrl.u32 %v40, 1
    %v42 = vmul.u32 %v41, 3
    %v43 = vsub.s32 %v37, %v42
    %v44 = vsub.s32 0, %v43
    %v45 = vsel %vm35, %v44, %v43
    %vm46 = vcmp.lt.s32.totalorder %v32, 0
    %v47 = vsub.s32 0, %v32
    %v48 = vsel %vm46, %v47, %v32
    %v49 = vmul.u32.u64.compose %v48, 2863311531
    %v50 = vextract.low.u32 %v49
    %v51 = vextract.high.u32 %v49
    %v52 = vshrl.u32 %v51, 1
    %v53 = vmul.u32 %v52, 3
    %v54 = vsub.s32 %v48, %v53
    %v55 = vsub.s32 0, %v54
    %v56 = vsel %vm46, %v55, %v54
    %vm57 = vcmp.lt.s32.totalorder %v33, 0
    %v58 = vsub.s32 0, %v33
    %v59 = vsel %vm57, %v58, %v33
    %v60 = vmul.u32.u64.compose %v59, 2863311531
    %v61 = vextract.low.u32 %v60
    %v62 = vextract.high.u32 %v60
    %v63 = vshrl.u32 %v62, 1
    %v64 = vmul.u32 %v63, 3
    %v65 = vsub.s32 %v59, %v64
    %v66 = vsub.s32 0, %v65
    %v67 = vsel %vm57, %v66, %v65
    %vm68 = vcmp.lt.s32.totalorder %v34, 0
    %v69 = vsub.s32 0, %v34
    %v70 = vsel %vm68, %v69, %v34
    %v71 = vmul.u32.u64.compose %v70, 2863311531
    %v72 = vextract.low.u32 %v71
    %v73 = vextract.high.u32 %v71
    %v74 = vshrl.u32 %v73, 1
    %v75 = vmul.u32 %v74, 3
    %v76 = vsub.s32 %v70, %v75
    %v77 = vsub.s32 0, %v76
    %v78 = vsel %vm68, %v77, %v76
    %vm79 = vcmp.ne.s32.totalorder %v45, 0
    %vm80 = vcmp.ne.s32.totalorder %v56, 0
    %vm81 = vcmp.ne.s32.totalorder %v67, 0
    %vm82 = vcmp.ne.s32.totalorder %v78, 0
    %vm83 = vcmp.lt.s32.totalorder %v45, 0
    %vm84 = vcmp.lt.s32.totalorder %v56, 0
    %vm85 = vcmp.lt.s32.totalorder %v67, 0
    %vm86 = vcmp.lt.s32.totalorder %v78, 0
    %vm87 = vmand %vm83, %vm79
    %vm88 = vmand %vm84, %vm80
    %vm89 = vmand %vm85, %vm81
    %vm90 = vmand %vm86, %vm82
    %v91 = vadd.s32 %v45, 3
    %v92 = vadd.s32 %v56, 3
    %v93 = vadd.s32 %v67, 3
    %v94 = vadd.s32 %v78, 3
    %v95 = vsel %vm87, %v91, %v45
    %v96 = vsel %vm88, %v92, %v56
    %v97 = vsel %vm89, %v93, %v67
    %v98 = vsel %vm90, %v94, %v78
    %vm99 = vcmp.eq.s32.totalorder %v95, 0
    %vm100 = vcmp.eq.s32.totalorder %v96, 0
    %vm101 = vcmp.eq.s32.totalorder %v97, 0
    %vm102 = vcmp.eq.s32.totalorder %v98, 0
    %vm103 = vcmp.eq.s32.totalorder %v95, 1
    %vm104 = vcmp.eq.s32.totalorder %v96, 1
    %vm105 = vcmp.eq.s32.totalorder %v97, 1
    %vm106 = vcmp.eq.s32.totalorder %v98, 1
    %v107 = vsel %vm103, 1.0, 0.5
    %v108 = vsel %vm104, 1.0, 0.5
    %v109 = vsel %vm105, 1.0, 0.5
    %v110 = vsel %vm106, 1.0, 0.5
    %v111 = vsel %vm99, 0.5, %v107
    %v112 = vsel %vm100, 0.5, %v108
    %v113 = vsel %vm101, 0.5, %v109
    %v114 = vsel %vm102, 0.5, %v110
    %vm115 = vcmp.eq.s32.totalorder %v95, 2
    %vm116 = vcmp.eq.s32.totalorder %v96, 2
    %vm117 = vcmp.eq.s32.totalorder %v97, 2
    %vm118 = vcmp.eq.s32.totalorder %v98, 2
    %v119 = vsel %vm115, 0.5, 0.0
    %v120 = vsel %vm116, 0.5, 0.0
    %v121 = vsel %vm117, 0.5, 0.0
    %v122 = vsel %vm118, 0.5, 0.0
    %v123 = vld [vmem:[#allocation2] sm:$0xf]
    %v124 = vtanh.pop %v123
    %v129 = vcombine.low %v111, %v112
    %v130 = vcombine.low %v113, %v114
    %v132 = vunpack.c.l.s4 1966171168
    %v133 = vunpack.c.0.s8 %v132
    %v134 = vlaneseq
    %v135 = vshrl.u32 %v134, 7
    %v136 = vsub.s32 %v133, %v135
    %v137 = vrot.slane %v129, %v136
    %v139 = vunpack.c.l.s4 1966171168
    %v140 = vunpack.c.0.s8 %v139
    %v141 = vlaneseq
    %v142 = vshrl.u32 %v141, 7
    %v143 = vsub.s32 %v140, %v142
    %v144 = vrot.slane %v130, %v143
    %v145 = vcombine.low %v137, %v144
    %v147 = vunpack.c.l.s4 1966171168
    %v148 = vunpack.c.0.s8 %v147
    %v149 = vlaneseq
    %v150 = vshrl.u32 %v149, 7
    %v151 = vsub.s32 %v148, %v150
    %v152 = vrot.slane %v145, %v151
    %v154 = vmul.f32 %v124, %v152
    %v159 = vcombine.low %v119, %v120
    %v160 = vcombine.low %v121, %v122
    %v162 = vunpack.c.l.s4 1966171168
    %v163 = vunpack.c.0.s8 %v162
    %v164 = vlaneseq
    %v165 = vshrl.u32 %v164, 7
    %v166 = vsub.s32 %v163, %v165
    %v167 = vrot.slane %v159, %v166
    %v169 = vunpack.c.l.s4 1966171168
    %v170 = vunpack.c.0.s8 %v169
    %v171 = vlaneseq
    %v172 = vshrl.u32 %v171, 7
    %v173 = vsub.s32 %v170, %v172
    %v174 = vrot.slane %v160, %v173
    %v175 = vcombine.low %v167, %v174
    %v177 = vunpack.c.l.s4 1966171168
    %v178 = vunpack.c.0.s8 %v177
    %v179 = vlaneseq
    %v180 = vshrl.u32 %v179, 7
    %v181 = vsub.s32 %v178, %v180
    %v182 = vrot.slane %v175, %v181
    %v184 = vadd.f32 %v154, %v182
    %v185 = vlaneseq
    %vm186 = vcmp.ge.s32.totalorder %v185, 0
    %vm187 = vcmp.lt.s32.totalorder %v185, 512
    %vm188 = vmand %vm186, %vm187
    %189 = vst.msk [vmem:[#allocation5] sm:$0xf] %vm188, %v184
    // Predicated region
    $region10: #{tpu_custom_call.1} parent=1 // pred_check
      _
    $region11: #{tpu_custom_call.1} parent=1 // pred_check_branch
      %191 = sbr.rel (0) target = $region13
    $region12: #{tpu_custom_call.1} parent=1 // pred_region
      %s193 = ssub.s32 64, 64
      %194 = vsyncadd [#allocation4], %s193
      %s196 = sshll.u32 [#allocation5], 4
      %s197 = int_to_ptr.vmem [resolvable:$true] %s196
      %199 = dma.vmem_to_hbm [thread:$0]  %s197, 64, %s1, [#allocation4]
    $region13: #{tpu_custom_call.1} parent=1 // pred_fallthru
      _
    // Predicated region
    $region14: #{tpu_custom_call.1} parent=1 // pred_check
      _
    $region15: #{tpu_custom_call.1} parent=1 // pred_check_branch
      %201 = sbr.rel (0) target = $region17
    $region16: #{tpu_custom_call.1} parent=1 // pred_region
      %202 = dma.done [#allocation4], 64
    $region17: #{tpu_custom_call.1} parent=1 // pred_fallthru
      _
    %203 = vsyncpa [#allocation3], 1
    %204 = vsyncpa [#allocation4], 1

</llo_original>
